<compile_context>
chip_gen: v7x
topology: tpu7x:2x2x1
jax: 0.10.0
libtpu: 0.0.40
codegen_flags: <defaults>
</compile_context>

<pallas_src>
import math
from functools import partial

import numpy as np
import jax
import jax.numpy as jnp
from jax import lax
from jax.experimental import pallas as pl
from jax.experimental.pallas import tpu as pltpu

EPS = 1e-9


def _round_up(x, m):
    return ((x + m - 1) // m) * m


# ----------------------------- Pallas kernel ------------------------------ #
def hsoftmax_kernel(att_ref, wgt_ref, sign_ref, bias_ref, out_ref):
    # att_ref : (TM, A)      compute dtype (f32 or bf16)
    # wgt_ref : (D, A, TV)   compute dtype (pre-gathered, depth-major)
    # sign_ref: (D, 1, TV)   f32
    # bias_ref: (D, 1, TV)   f32
    # out_ref : (TM, TV)     f32   (accumulated in place; single visit/block)
    out_ref[...] = jnp.zeros_like(out_ref)

    def depth_step(d, carry):
        # MXU: (TM, A) x (A, TV) -> (TM, TV) f32
        h = jnp.dot(att_ref[...], wgt_ref[d],
                    preferred_element_type=jnp.float32)
        p = jax.nn.sigmoid(h)                         # EUP
        p = p * sign_ref[d] + bias_ref[d]             # VPU, (1, TV) broadcast
        p = jnp.clip(p, EPS, 1.0 - EPS)               # matches torch clip
        out_ref[...] += jnp.log(p)                    # EUP + VPU accumulate
        return carry

    # Short static trip count -> fully unrolled for LLO scheduling visibility.
    lax.fori_loop(0, wgt_ref.shape[0], depth_step, 0, unroll=True)


# ------------------------------ JAX wrapper -------------------------------- #
@partial(jax.jit,
         static_argnames=("vocab_size", "tree_depth", "tm", "tv",
                          "compute_dtype"))
def hsoftmax_forward(att, W, path_index, path_sign, path_bias,
                     vocab_size, tree_depth, tm=None, tv=None,
                     compute_dtype=jnp.bfloat16):
    """att: (B, T, A); W: (inner_cnt, A). Returns logp: (B, T, vocab_size)."""
    B, T, A = att.shape
    M = B * T
    V, D = vocab_size, tree_depth

    # ---- tile selection (lane-dense vocab tiles, big M tiles) ----
    if tv is None:
        tv = min(512, _round_up(V, 128))
    if tm is None:
        tm = min(256, _round_up(M, 8))
    tm = _round_up(tm, 8)
    tv = _round_up(tv, 128)

    itemsize = jnp.dtype(compute_dtype).itemsize
    # Keep the (double-buffered) weight tile within a conservative VMEM budget
    # so the same config also fits v7x's 64 MiB VMEM.
    while tv > 128 and 2 * D * A * tv * itemsize > 24 * 1024 * 1024:
        tv = max(128, _round_up(tv // 2, 128))

    M_pad = _round_up(M, tm)
    V_pad = _round_up(V, tv)

    # ---- glue: depth-major path tables, padded along the vocab axis ----
    pi = path_index.reshape(V, D).T                       # (D, V) int32
    ps = path_sign.reshape(V, D).T.astype(jnp.float32)    # (D, V)
    pb = path_bias.reshape(V, D).T.astype(jnp.float32)    # (D, V)
    if V_pad != V:
        pad = ((0, 0), (0, V_pad - V))
        pi = jnp.pad(pi, pad)                             # pad cols reuse row 0
        ps = jnp.pad(ps, pad, constant_values=1.0)
        pb = jnp.pad(pb, pad, constant_values=0.0)

    # Row-gather W so no cross-lane gather happens inside the kernel.
    # (For extremely large D*V one could stream this per vocab tile instead of
    #  materializing the full (D, A, V_pad) array in HBM.)
    Wg = jnp.transpose(W[pi], (0, 2, 1)).astype(compute_dtype)   # (D, A, V_pad)
    sign3 = ps.reshape(D, 1, V_pad)
    bias3 = pb.reshape(D, 1, V_pad)

    attf = att.reshape(M, A)
    if M_pad != M:
        attf = jnp.pad(attf, ((0, M_pad - M), (0, 0)))
    attf = attf.astype(compute_dtype)

    nv, nm = V_pad // tv, M_pad // tm

    cost = pl.CostEstimate(
        flops=2 * M_pad * A * D * V_pad,
        transcendentals=2 * M_pad * D * V_pad,
        bytes_accessed=((M_pad * A + D * A * V_pad) * itemsize
                        + 2 * D * V_pad * 4 + M_pad * V_pad * 4),
    )

    out = pl.pallas_call(
        hsoftmax_kernel,
        out_shape=jax.ShapeDtypeStruct((M_pad, V_pad), jnp.float32),
        grid_spec=pltpu.PrefetchScalarGridSpec(
            num_scalar_prefetch=0,
            # vocab-major grid: the weight / sign / bias blocks keep the same
            # block index across all inner M steps -> fetched once per v tile.
            grid=(nv, nm),
            in_specs=[
                pl.BlockSpec((tm, A), lambda v, m: (m, 0)),        # att
                pl.BlockSpec((D, A, tv), lambda v, m: (0, 0, v)),  # weights
                pl.BlockSpec((D, 1, tv), lambda v, m: (0, 0, v)),  # path_sign
                pl.BlockSpec((D, 1, tv), lambda v, m: (0, 0, v)),  # path_bias
            ],
            out_specs=pl.BlockSpec((tm, tv), lambda v, m: (m, v)),
        ),
        compiler_params=pltpu.CompilerParams(
            dimension_semantics=("parallel", "parallel"),
            vmem_limit_bytes=64 * 1024 * 1024,
        ),
        cost_estimate=cost,
    )(attf, Wg, sign3, bias3)

    return out[:M, :V].reshape(B, T, V)


# --------------------- pure-JAX reference (torch semantics) ---------------- #
def ref_forward(att, W, path_index, path_sign, path_bias, V, D, eps=EPS):
    h = att @ W.T                          # Linear, no bias
    h = jax.nn.sigmoid(h)
    h = h[..., path_index]                 # index_select along last dim
    h = h * path_sign + path_bias
    H = h.reshape(h.shape[0], -1, V, D)
    H = jnp.clip(H, eps, 1.0 - eps)
    return jnp.sum(jnp.log(H), -1)


# ------------------- synthetic balanced "Huffman" tree --------------------- #
def build_balanced_tree_paths(vocab_size):
    depth = int(math.log2(vocab_size))
    assert 2 ** depth == vocab_size
    inner_cnt = vocab_size - 1             # complete binary tree, heap-indexed
    path_index = np.zeros((vocab_size, depth), np.int32)
    path_sign = np.zeros((vocab_size, depth), np.float32)
    path_bias = np.zeros((vocab_size, depth), np.float32)
    for v in range(vocab_size):
        n = 0
        for d in range(depth):
            bit = (v >> (depth - 1 - d)) & 1
            path_index[v, d] = n
            path_sign[v, d] = 1.0 if bit == 0 else -1.0   # left: p, right: 1-p
            path_bias[v, d] = 0.0 if bit == 0 else 1.0
            n = 2 * n + 1 + bit
    return path_index, path_sign, path_bias, inner_cnt, depth


if __name__ == "__main__":
    vocab_size = 16
    attention_dim = 32
    batch, seq = 2, 8

    path_index_np, path_sign_np, path_bias_np, inner_cnt, tree_depth = \
        build_balanced_tree_paths(vocab_size)

    key = jax.random.PRNGKey(0)
    k_att, k_w, k_att2 = jax.random.split(key, 3)
    att = jax.random.normal(k_att, (batch, seq, attention_dim), jnp.float32)
    # nn.Linear(attention_dim, inner_cnt, bias=False).weight : (inner_cnt, A)
    W = jax.random.normal(k_w, (inner_cnt, attention_dim), jnp.float32) * 0.1

    path_index = jnp.asarray(path_index_np.reshape(-1), jnp.int32)
    path_sign = jnp.asarray(path_sign_np.reshape(-1), jnp.float32)
    path_bias = jnp.asarray(path_bias_np.reshape(-1), jnp.float32)

    ref = jax.block_until_ready(
        ref_forward(att, W, path_index, path_sign, path_bias,
                    vocab_size, tree_depth))

    # 1) exact-semantics f32 run, default adaptive tiles
    out_f32 = hsoftmax_forward(att, W, path_index, path_sign, path_bias,
                               vocab_size=vocab_size, tree_depth=tree_depth,
                               compute_dtype=jnp.float32)
    out_f32 = jax.block_until_ready(out_f32)
    assert out_f32.shape == (batch, seq, vocab_size)
    np.testing.assert_allclose(np.asarray(out_f32), np.asarray(ref),
                               rtol=1e-5, atol=1e-5)
    # sanity: a balanced tree gives a proper distribution -> logsumexp ~ 0
    lse = jax.nn.logsumexp(out_f32, axis=-1)
    np.testing.assert_allclose(np.asarray(lse),
                               np.zeros_like(np.asarray(lse)), atol=1e-4)

    # 2) multi-tile grid + ragged M (padded inside the wrapper), still exact f32
    batch2, seq2 = 3, 50                     # M = 150 -> padded to 192 (tm=64)
    att2 = jax.random.normal(k_att2, (batch2, seq2, attention_dim), jnp.float32)
    ref2 = ref_forward(att2, W, path_index, path_sign, path_bias,
                       vocab_size, tree_depth)
    out2 = hsoftmax_forward(att2, W, path_index, path_sign, path_bias,
                            vocab_size=vocab_size, tree_depth=tree_depth,
                            tm=64, tv=128, compute_dtype=jnp.float32)
    out2 = jax.block_until_ready(out2)
    np.testing.assert_allclose(np.asarray(out2), np.asarray(ref2),
                               rtol=1e-5, atol=1e-5)

    # 3) bf16 matmul operands (fast default path); looser tolerance vs f32 ref
    out_bf16 = hsoftmax_forward(att, W, path_index, path_sign, path_bias,
                                vocab_size=vocab_size, tree_depth=tree_depth,
                                compute_dtype=jnp.bfloat16)
    out_bf16 = jax.block_until_ready(out_bf16)
    np.testing.assert_allclose(np.asarray(out_bf16), np.asarray(ref),
                               rtol=5e-2, atol=5e-2)

    print("KERNEL_OK")
</pallas_src>

<mosaic_0001>
module attributes {stable_mosaic.version = 11 : i64} {
  func.func @hsoftmax_kernel(%arg0: i32, %arg1: i32, %arg2: memref<16x32xf32, #tpu.memory_space<vmem>>, %arg3: memref<4x32x128xf32, #tpu.memory_space<vmem>>, %arg4: memref<4x1x128xf32, #tpu.memory_space<vmem>>, %arg5: memref<4x1x128xf32, #tpu.memory_space<vmem>>, %arg6: memref<16x128xf32, #tpu.memory_space<vmem>>) attributes {dimension_semantics = [#tpu.dimension_semantics<parallel>, #tpu.dimension_semantics<parallel>], iteration_bounds = array<i64: 1, 1>, scalar_prefetch = 0 : i64, scratch_operands = 0 : i64, tpu.core_type = #tpu.core_type<tc>, window_params = [{transform_indices = @transform_0, window_bounds = array<i64: 16, 32>}, {transform_indices = @transform_1, window_bounds = array<i64: 4, 32, 128>}, {transform_indices = @transform_2, window_bounds = array<i64: 4, 1, 128>}, {transform_indices = @transform_3, window_bounds = array<i64: 4, 1, 128>}, {transform_indices = @transform_4, window_bounds = array<i64: 16, 128>}]} {
    %cst = arith.constant 0.000000e+00 : f32
    %0 = vector.broadcast %cst : f32 to vector<16x128xf32>
    %c0 = arith.constant 0 : index
    %c0_0 = arith.constant 0 : index
    %1 = vector.load %arg6[%c0, %c0_0] : memref<16x128xf32, #tpu.memory_space<vmem>>, vector<16x128xf32>
    tpu.vector_store %arg6[%c0, %c0_0], %0 {strides = array<i32>} : memref<16x128xf32, #tpu.memory_space<vmem>>, vector<16x128xf32>,
    %c0_i32 = arith.constant 0 : i32
    %c0_1 = arith.constant 0 : index
    %c0_2 = arith.constant 0 : index
    %2 = vector.load %arg2[%c0_1, %c0_2] : memref<16x32xf32, #tpu.memory_space<vmem>>, vector<16x32xf32>
    %3 = arith.index_cast %c0_i32 : i32 to index
    %c0_3 = arith.constant 0 : index
    %c0_4 = arith.constant 0 : index
    %4 = vector.load %arg3[%3, %c0_3, %c0_4] : memref<4x32x128xf32, #tpu.memory_space<vmem>>, vector<1x32x128xf32>
    %5 = vector.shape_cast %4 : vector<1x32x128xf32> to vector<32x128xf32>
    %cst_5 = arith.constant dense<0.000000e+00> : vector<16x128xf32>
    %6 = tpu.matmul %2, %5, %cst_5 {dimension_numbers = #tpu.dot_dimension_numbers<[1], [0], [0], [1], [0, 0, 1, 1], [], []>} : vector<16x32xf32>, vector<32x128xf32>, vector<16x128xf32> -> vector<16x128xf32>
    %7 = arith.negf %6 : vector<16x128xf32>
    %8 = math.exp %7 : vector<16x128xf32>
    %cst_6 = arith.constant 1.000000e+00 : f32
    %9 = vector.broadcast %cst_6 : f32 to vector<16x128xf32>
    %10 = arith.addf %9, %8 : vector<16x128xf32>
    %11 = arith.divf %9, %10 : vector<16x128xf32>
    %12 = arith.index_cast %c0_i32 : i32 to index
    %c0_7 = arith.constant 0 : index
    %c0_8 = arith.constant 0 : index
    %13 = vector.load %arg4[%12, %c0_7, %c0_8] : memref<4x1x128xf32, #tpu.memory_space<vmem>>, vector<1x1x128xf32>
    %14 = vector.shape_cast %13 : vector<1x1x128xf32> to vector<1x128xf32>
    %15 = vector.broadcast %14 : vector<1x128xf32> to vector<16x128xf32>
    %16 = arith.mulf %11, %15 : vector<16x128xf32>
    %17 = arith.index_cast %c0_i32 : i32 to index
    %c0_9 = arith.constant 0 : index
    %c0_10 = arith.constant 0 : index
    %18 = vector.load %arg5[%17, %c0_9, %c0_10] : memref<4x1x128xf32, #tpu.memory_space<vmem>>, vector<1x1x128xf32>
    %19 = vector.shape_cast %18 : vector<1x1x128xf32> to vector<1x128xf32>
    %20 = vector.broadcast %19 : vector<1x128xf32> to vector<16x128xf32>
    %21 = arith.addf %16, %20 : vector<16x128xf32>
    %cst_11 = arith.constant 9.99999971E-10 : f32
    %cst_12 = arith.constant 1.000000e+00 : f32
    %22 = vector.broadcast %cst_11 : f32 to vector<16x128xf32>
    %23 = arith.maximumf %22, %21 : vector<16x128xf32>
    %24 = vector.broadcast %cst_12 : f32 to vector<16x128xf32>
    %25 = arith.minimumf %24, %23 : vector<16x128xf32>
    %c0_13 = arith.constant 0 : index
    %c0_14 = arith.constant 0 : index
    %26 = vector.load %arg6[%c0_13, %c0_14] : memref<16x128xf32, #tpu.memory_space<vmem>>, vector<16x128xf32>
    %27 = math.log %25 : vector<16x128xf32>
    %28 = arith.addf %26, %27 : vector<16x128xf32>
    %c0_15 = arith.constant 0 : index
    %c0_16 = arith.constant 0 : index
    %29 = vector.load %arg6[%c0_15, %c0_16] : memref<16x128xf32, #tpu.memory_space<vmem>>, vector<16x128xf32>
    tpu.vector_store %arg6[%c0_15, %c0_16], %28 {strides = array<i32>} : memref<16x128xf32, #tpu.memory_space<vmem>>, vector<16x128xf32>,
    %c1_i32 = arith.constant 1 : i32
    %c0_17 = arith.constant 0 : index
    %c0_18 = arith.constant 0 : index
    %30 = vector.load %arg2[%c0_17, %c0_18] : memref<16x32xf32, #tpu.memory_space<vmem>>, vector<16x32xf32>
    %31 = arith.index_cast %c1_i32 : i32 to index
    %c0_19 = arith.constant 0 : index
    %c0_20 = arith.constant 0 : index
    %32 = vector.load %arg3[%31, %c0_19, %c0_20] : memref<4x32x128xf32, #tpu.memory_space<vmem>>, vector<1x32x128xf32>
    %33 = vector.shape_cast %32 : vector<1x32x128xf32> to vector<32x128xf32>
    %cst_21 = arith.constant dense<0.000000e+00> : vector<16x128xf32>
    %34 = tpu.matmul %30, %33, %cst_21 {dimension_numbers = #tpu.dot_dimension_numbers<[1], [0], [0], [1], [0, 0, 1, 1], [], []>} : vector<16x32xf32>, vector<32x128xf32>, vector<16x128xf32> -> vector<16x128xf32>
    %35 = arith.negf %34 : vector<16x128xf32>
    %36 = math.exp %35 : vector<16x128xf32>
    %cst_22 = arith.constant 1.000000e+00 : f32
    %37 = vector.broadcast %cst_22 : f32 to vector<16x128xf32>
    %38 = arith.addf %37, %36 : vector<16x128xf32>
    %39 = arith.divf %37, %38 : vector<16x128xf32>
    %40 = arith.index_cast %c1_i32 : i32 to index
    %c0_23 = arith.constant 0 : index
    %c0_24 = arith.constant 0 : index
    %41 = vector.load %arg4[%40, %c0_23, %c0_24] : memref<4x1x128xf32, #tpu.memory_space<vmem>>, vector<1x1x128xf32>
    %42 = vector.shape_cast %41 : vector<1x1x128xf32> to vector<1x128xf32>
    %43 = vector.broadcast %42 : vector<1x128xf32> to vector<16x128xf32>
    %44 = arith.mulf %39, %43 : vector<16x128xf32>
    %45 = arith.index_cast %c1_i32 : i32 to index
    %c0_25 = arith.constant 0 : index
    %c0_26 = arith.constant 0 : index
    %46 = vector.load %arg5[%45, %c0_25, %c0_26] : memref<4x1x128xf32, #tpu.memory_space<vmem>>, vector<1x1x128xf32>
    %47 = vector.shape_cast %46 : vector<1x1x128xf32> to vector<1x128xf32>
    %48 = vector.broadcast %47 : vector<1x128xf32> to vector<16x128xf32>
    %49 = arith.addf %44, %48 : vector<16x128xf32>
    %cst_27 = arith.constant 9.99999971E-10 : f32
    %cst_28 = arith.constant 1.000000e+00 : f32
    %50 = vector.broadcast %cst_27 : f32 to vector<16x128xf32>
    %51 = arith.maximumf %50, %49 : vector<16x128xf32>
    %52 = vector.broadcast %cst_28 : f32 to vector<16x128xf32>
    %53 = arith.minimumf %52, %51 : vector<16x128xf32>
    %c0_29 = arith.constant 0 : index
    %c0_30 = arith.constant 0 : index
    %54 = vector.load %arg6[%c0_29, %c0_30] : memref<16x128xf32, #tpu.memory_space<vmem>>, vector<16x128xf32>
    %55 = math.log %53 : vector<16x128xf32>
    %56 = arith.addf %54, %55 : vector<16x128xf32>
    %c0_31 = arith.constant 0 : index
    %c0_32 = arith.constant 0 : index
    %57 = vector.load %arg6[%c0_31, %c0_32] : memref<16x128xf32, #tpu.memory_space<vmem>>, vector<16x128xf32>
    tpu.vector_store %arg6[%c0_31, %c0_32], %56 {strides = array<i32>} : memref<16x128xf32, #tpu.memory_space<vmem>>, vector<16x128xf32>,
    %c2_i32 = arith.constant 2 : i32
    %c0_33 = arith.constant 0 : index
    %c0_34 = arith.constant 0 : index
    %58 = vector.load %arg2[%c0_33, %c0_34] : memref<16x32xf32, #tpu.memory_space<vmem>>, vector<16x32xf32>
    %59 = arith.index_cast %c2_i32 : i32 to index
    %c0_35 = arith.constant 0 : index
    %c0_36 = arith.constant 0 : index
    %60 = vector.load %arg3[%59, %c0_35, %c0_36] : memref<4x32x128xf32, #tpu.memory_space<vmem>>, vector<1x32x128xf32>
    %61 = vector.shape_cast %60 : vector<1x32x128xf32> to vector<32x128xf32>
    %cst_37 = arith.constant dense<0.000000e+00> : vector<16x128xf32>
    %62 = tpu.matmul %58, %61, %cst_37 {dimension_numbers = #tpu.dot_dimension_numbers<[1], [0], [0], [1], [0, 0, 1, 1], [], []>} : vector<16x32xf32>, vector<32x128xf32>, vector<16x128xf32> -> vector<16x128xf32>
    %63 = arith.negf %62 : vector<16x128xf32>
    %64 = math.exp %63 : vector<16x128xf32>
    %cst_38 = arith.constant 1.000000e+00 : f32
    %65 = vector.broadcast %cst_38 : f32 to vector<16x128xf32>
    %66 = arith.addf %65, %64 : vector<16x128xf32>
    %67 = arith.divf %65, %66 : vector<16x128xf32>
    %68 = arith.index_cast %c2_i32 : i32 to index
    %c0_39 = arith.constant 0 : index
    %c0_40 = arith.constant 0 : index
    %69 = vector.load %arg4[%68, %c0_39, %c0_40] : memref<4x1x128xf32, #tpu.memory_space<vmem>>, vector<1x1x128xf32>
    %70 = vector.shape_cast %69 : vector<1x1x128xf32> to vector<1x128xf32>
    %71 = vector.broadcast %70 : vector<1x128xf32> to vector<16x128xf32>
    %72 = arith.mulf %67, %71 : vector<16x128xf32>
    %73 = arith.index_cast %c2_i32 : i32 to index
    %c0_41 = arith.constant 0 : index
    %c0_42 = arith.constant 0 : index
    %74 = vector.load %arg5[%73, %c0_41, %c0_42] : memref<4x1x128xf32, #tpu.memory_space<vmem>>, vector<1x1x128xf32>
    %75 = vector.shape_cast %74 : vector<1x1x128xf32> to vector<1x128xf32>
    %76 = vector.broadcast %75 : vector<1x128xf32> to vector<16x128xf32>
    %77 = arith.addf %72, %76 : vector<16x128xf32>
    %cst_43 = arith.constant 9.99999971E-10 : f32
    %cst_44 = arith.constant 1.000000e+00 : f32
    %78 = vector.broadcast %cst_43 : f32 to vector<16x128xf32>
    %79 = arith.maximumf %78, %77 : vector<16x128xf32>
    %80 = vector.broadcast %cst_44 : f32 to vector<16x128xf32>
    %81 = arith.minimumf %80, %79 : vector<16x128xf32>
    %c0_45 = arith.constant 0 : index
    %c0_46 = arith.constant 0 : index
    %82 = vector.load %arg6[%c0_45, %c0_46] : memref<16x128xf32, #tpu.memory_space<vmem>>, vector<16x128xf32>
    %83 = math.log %81 : vector<16x128xf32>
    %84 = arith.addf %82, %83 : vector<16x128xf32>
    %c0_47 = arith.constant 0 : index
    %c0_48 = arith.constant 0 : index
    %85 = vector.load %arg6[%c0_47, %c0_48] : memref<16x128xf32, #tpu.memory_space<vmem>>, vector<16x128xf32>
    tpu.vector_store %arg6[%c0_47, %c0_48], %84 {strides = array<i32>} : memref<16x128xf32, #tpu.memory_space<vmem>>, vector<16x128xf32>,
    %c3_i32 = arith.constant 3 : i32
    %c0_49 = arith.constant 0 : index
    %c0_50 = arith.constant 0 : index
    %86 = vector.load %arg2[%c0_49, %c0_50] : memref<16x32xf32, #tpu.memory_space<vmem>>, vector<16x32xf32>
    %87 = arith.index_cast %c3_i32 : i32 to index
    %c0_51 = arith.constant 0 : index
    %c0_52 = arith.constant 0 : index
    %88 = vector.load %arg3[%87, %c0_51, %c0_52] : memref<4x32x128xf32, #tpu.memory_space<vmem>>, vector<1x32x128xf32>
    %89 = vector.shape_cast %88 : vector<1x32x128xf32> to vector<32x128xf32>
    %cst_53 = arith.constant dense<0.000000e+00> : vector<16x128xf32>
    %90 = tpu.matmul %86, %89, %cst_53 {dimension_numbers = #tpu.dot_dimension_numbers<[1], [0], [0], [1], [0, 0, 1, 1], [], []>} : vector<16x32xf32>, vector<32x128xf32>, vector<16x128xf32> -> vector<16x128xf32>
    %91 = arith.negf %90 : vector<16x128xf32>
    %92 = math.exp %91 : vector<16x128xf32>
    %cst_54 = arith.constant 1.000000e+00 : f32
    %93 = vector.broadcast %cst_54 : f32 to vector<16x128xf32>
    %94 = arith.addf %93, %92 : vector<16x128xf32>
    %95 = arith.divf %93, %94 : vector<16x128xf32>
    %96 = arith.index_cast %c3_i32 : i32 to index
    %c0_55 = arith.constant 0 : index
    %c0_56 = arith.constant 0 : index
    %97 = vector.load %arg4[%96, %c0_55, %c0_56] : memref<4x1x128xf32, #tpu.memory_space<vmem>>, vector<1x1x128xf32>
    %98 = vector.shape_cast %97 : vector<1x1x128xf32> to vector<1x128xf32>
    %99 = vector.broadcast %98 : vector<1x128xf32> to vector<16x128xf32>
    %100 = arith.mulf %95, %99 : vector<16x128xf32>
    %101 = arith.index_cast %c3_i32 : i32 to index
    %c0_57 = arith.constant 0 : index
    %c0_58 = arith.constant 0 : index
    %102 = vector.load %arg5[%101, %c0_57, %c0_58] : memref<4x1x128xf32, #tpu.memory_space<vmem>>, vector<1x1x128xf32>
    %103 = vector.shape_cast %102 : vector<1x1x128xf32> to vector<1x128xf32>
    %104 = vector.broadcast %103 : vector<1x128xf32> to vector<16x128xf32>
    %105 = arith.addf %100, %104 : vector<16x128xf32>
    %cst_59 = arith.constant 9.99999971E-10 : f32
    %cst_60 = arith.constant 1.000000e+00 : f32
    %106 = vector.broadcast %cst_59 : f32 to vector<16x128xf32>
    %107 = arith.maximumf %106, %105 : vector<16x128xf32>
    %108 = vector.broadcast %cst_60 : f32 to vector<16x128xf32>
    %109 = arith.minimumf %108, %107 : vector<16x128xf32>
    %c0_61 = arith.constant 0 : index
    %c0_62 = arith.constant 0 : index
    %110 = vector.load %arg6[%c0_61, %c0_62] : memref<16x128xf32, #tpu.memory_space<vmem>>, vector<16x128xf32>
    %111 = math.log %109 : vector<16x128xf32>
    %112 = arith.addf %110, %111 : vector<16x128xf32>
    %c0_63 = arith.constant 0 : index
    %c0_64 = arith.constant 0 : index
    %113 = vector.load %arg6[%c0_63, %c0_64] : memref<16x128xf32, #tpu.memory_space<vmem>>, vector<16x128xf32>
    tpu.vector_store %arg6[%c0_63, %c0_64], %112 {strides = array<i32>} : memref<16x128xf32, #tpu.memory_space<vmem>>, vector<16x128xf32>,
    %c4_i32 = arith.constant 4 : i32
    return
  }
  func.func @transform_0(%arg0: i32, %arg1: i32) -> (i32, i32) {
    %c0_i32 = arith.constant 0 : i32
    %c0_i32_0 = arith.constant 0 : i32
    return %arg1, %c0_i32 : i32, i32
  }
  func.func @transform_1(%arg0: i32, %arg1: i32) -> (i32, i32, i32) {
    %c0_i32 = arith.constant 0 : i32
    %c0_i32_0 = arith.constant 0 : i32
    %c0_i32_1 = arith.constant 0 : i32
    return %c0_i32, %c0_i32_0, %arg0 : i32, i32, i32
  }
  func.func @transform_2(%arg0: i32, %arg1: i32) -> (i32, i32, i32) {
    %c0_i32 = arith.constant 0 : i32
    %c0_i32_0 = arith.constant 0 : i32
    %c0_i32_1 = arith.constant 0 : i32
    return %c0_i32, %c0_i32_0, %arg0 : i32, i32, i32
  }
  func.func @transform_3(%arg0: i32, %arg1: i32) -> (i32, i32, i32) {
    %c0_i32 = arith.constant 0 : i32
    %c0_i32_0 = arith.constant 0 : i32
    %c0_i32_1 = arith.constant 0 : i32
    return %c0_i32, %c0_i32_0, %arg0 : i32, i32, i32
  }
  func.func @transform_4(%arg0: i32, %arg1: i32) -> (i32, i32) {
    %c0_i32 = arith.constant 0 : i32
    return %arg1, %arg0 : i32, i32
  }
}

</mosaic_0001>

<llo_original>
// kernel: hsoftmax_forward.1
$region0: #{hsoftmax_forward.1}
  #allocation0 [shape = 'u32[]', space=smem, size = 0x4, offset = 0x4, fixed_abs, tag = 'smem constant byte address 0x4 - core index']
  #allocation1 [shape = 'u32[144,128]{1,0:T(1,128)}', space=vmem, size = 0x12000, scoped, tag = 'internal scratch']
  %s0 = inlined_call_operand.hbm [shape: f32[16,32], index: 0, kind: input, shape index: {}]
  %s1 = inlined_call_operand.hbm [shape: f32[4,32,128], index: 1, kind: input, shape index: {}]
  %s2 = inlined_call_operand.hbm [shape: f32[4,1,128], index: 2, kind: input, shape index: {}]
  %s3 = inlined_call_operand.hbm [shape: f32[4,1,128], index: 3, kind: input, shape index: {}]
  %s4 = inlined_call_operand.hbm [shape: f32[16,128], index: 4, kind: output, shape index: {}]
  %s5 = sld [smem:[#allocation0]]
  $region42: #{hsoftmax_forward.1} parent=0
    _
  %s7 = ssub.s32 1, %s5
  %s8 = scalar_select 0, %s7, %s5
  $region1: #{hsoftmax_forward.1} parent=0
    #allocation2 [shape = 'u8[8192]{0}', space=vmem, size = 0x2000, scoped, tag = 'input window, operand 0, single buffered']
    #allocation3 [shape = 's32[1]{0}', space=sflag, size = 0x4, scoped, tag = 'scoped memory for hsoftmax_forward.1']
    #allocation4 [shape = 's32[1]{0}', space=sflag, size = 0x4, scoped, tag = 'scoped memory for hsoftmax_forward.1']
    #allocation5 [shape = 'u8[65536]{0}', space=vmem, size = 0x10000, scoped, tag = 'input window, operand 1, single buffered']
    #allocation6 [shape = 's32[1]{0}', space=sflag, size = 0x4, scoped, tag = 'scoped memory for hsoftmax_forward.1']
    #allocation7 [shape = 'u8[2048]{0}', space=vmem, size = 0x800, scoped, tag = 'input window, operand 2, single buffered']
    #allocation8 [shape = 'u8[2048]{0}', space=vmem, size = 0x800, scoped, tag = 'input window, operand 3, single buffered']
    #allocation9 [shape = 's32[1]{0}', space=sflag, size = 0x4, scoped, tag = 'scoped memory for hsoftmax_forward.1']
    #allocation10 [shape = 'u8[8192]{0}', space=vmem, size = 0x2000, scoped, tag = 'output window, operand 0, single buffered']
    %9 = vsyncpa [#allocation3], 0
    %10 = vsyncpa [#allocation6], 0
    %11 = vsyncpa [#allocation9], 0
    %12 = vsyncpa [#allocation4], 0
    // Predicated region
    $region2: #{hsoftmax_forward.1} parent=1 // pred_check
      _
    $region3: #{hsoftmax_forward.1} parent=1 // pred_check_branch
      %14 = sbr.rel (0) target = $region5
    $region4: #{hsoftmax_forward.1} parent=1 // pred_region
      %s16 = ssub.s32 256, 256
      %17 = vsyncadd [#allocation3], %s16
      %s18 = sshll.u32 [#allocation2], 4
      %s19 = int_to_ptr.vmem [resolvable:$true] %s18
      %24 = dma.hbm_to_vmem [thread:$0]  %s0, 256, %s19, [#allocation3], 128, 128, 8
    $region5: #{hsoftmax_forward.1} parent=1 // pred_fallthru
      _
    // Predicated region
    $region6: #{hsoftmax_forward.1} parent=1 // pred_check
      _
    $region7: #{hsoftmax_forward.1} parent=1 // pred_check_branch
      %26 = sbr.rel (0) target = $region9
    $region8: #{hsoftmax_forward.1} parent=1 // pred_region
      %s28 = ssub.s32 2048, 2048
      %29 = vsyncadd [#allocation6], %s28
      %s30 = sshll.u32 [#allocation5], 4
      %s31 = int_to_ptr.vmem [resolvable:$true] %s30
      %36 = dma.hbm_to_vmem [thread:$0]  %s1, 2048, %s31, [#allocation6], 128, 128, 8
    $region9: #{hsoftmax_forward.1} parent=1 // pred_fallthru
      _
    // Predicated region
    $region10: #{hsoftmax_forward.1} parent=1 // pred_check
      _
    $region11: #{hsoftmax_forward.1} parent=1 // pred_check_branch
      %38 = sbr.rel (0) target = $region13
    $region12: #{hsoftmax_forward.1} parent=1 // pred_region
      %s40 = ssub.s32 64, 64
      %41 = vsyncadd [#allocation6], %s40
      %s42 = sshll.u32 [#allocation7], 4
      %s43 = int_to_ptr.vmem [resolvable:$true] %s42
      %48 = dma.hbm_to_vmem [thread:$0]  %s2, 64, %s43, [#allocation6], 16, 16, 1
    $region13: #{hsoftmax_forward.1} parent=1 // pred_fallthru
      _
    // Predicated region
    $region14: #{hsoftmax_forward.1} parent=1 // pred_check
      _
    $region15: #{hsoftmax_forward.1} parent=1 // pred_check_branch
      %50 = sbr.rel (0) target = $region17
    $region16: #{hsoftmax_forward.1} parent=1 // pred_region
      %s52 = ssub.s32 64, 64
      %53 = vsyncadd [#allocation9], %s52
      %s54 = sshll.u32 [#allocation8], 4
      %s55 = int_to_ptr.vmem [resolvable:$true] %s54
      %60 = dma.hbm_to_vmem [thread:$0]  %s3, 64, %s55, [#allocation9], 16, 16, 1
    $region17: #{hsoftmax_forward.1} parent=1 // pred_fallthru
      _
    // Predicated region
    $region18: #{hsoftmax_forward.1} parent=1 // pred_check
      _
    $region19: #{hsoftmax_forward.1} parent=1 // pred_check_branch
      %62 = sbr.rel (0) target = $region21
    $region20: #{hsoftmax_forward.1} parent=1 // pred_region
      %63 = dma.done [#allocation3], 256
    $region21: #{hsoftmax_forward.1} parent=1 // pred_fallthru
      _
    // Predicated region
    $region22: #{hsoftmax_forward.1} parent=1 // pred_check
      _
    $region23: #{hsoftmax_forward.1} parent=1 // pred_check_branch
      %65 = sbr.rel (0) target = $region25
    $region24: #{hsoftmax_forward.1} parent=1 // pred_region
      %66 = dma.done [#allocation6], 2048
    $region25: #{hsoftmax_forward.1} parent=1 // pred_fallthru
      _
    // Predicated region
    $region26: #{hsoftmax_forward.1} parent=1 // pred_check
      _
    $region27: #{hsoftmax_forward.1} parent=1 // pred_check_branch
      %68 = sbr.rel (0) target = $region29
    $region28: #{hsoftmax_forward.1} parent=1 // pred_region
      %69 = dma.done [#allocation6], 64
    $region29: #{hsoftmax_forward.1} parent=1 // pred_fallthru
      _
    // Predicated region
    $region30: #{hsoftmax_forward.1} parent=1 // pred_check
      _
    $region31: #{hsoftmax_forward.1} parent=1 // pred_check_branch
      %71 = sbr.rel (0) target = $region33
    $region32: #{hsoftmax_forward.1} parent=1 // pred_region
      %72 = dma.done [#allocation9], 64
    $region33: #{hsoftmax_forward.1} parent=1 // pred_fallthru
      _
    %73 = vst [vmem:[#allocation10] sm:$0xff] 0.0
    %74 = vst [vmem:[#allocation10 + $0x8] sm:$0xff] 0.0
    %v75 = vld [vmem:[#allocation2] sm:$0xff]
    %v76 = vld [vmem:[#allocation2 + $0x8] sm:$0xff]
    %v77 = vld [vmem:[#allocation5] sm:$0xff]
    %v78 = vld [vmem:[#allocation5 + $0x8] sm:$0xff]
    %v79 = vld [vmem:[#allocation5 + $0x10] sm:$0xff]
    %v80 = vld [vmem:[#allocation5 + $0x18] sm:$0xff]
    %vm81 = vcmask 261120
    %v83 = vsel %vm81, %v75, 0
    %v86 = vsel %vm81, %v76, 0
    %88 = vmatprep.subr.mxu0 0.0
    %89 = vmatpush1.msra.mxu0 %v77
    %90 = vmatprep.subr.mxu0 0.0
    %91 = vmatpush1.msra.mxu0 %v78
    %92 = vmatprep.subr.mxu0 0.0
    %93 = vmatpush1.msra.mxu0 %v79
    %94 = vmatprep.subr.mxu0 0.0
    %95 = vmatpush1.msra.mxu0 %v80
    %96 = vmatprep.subr.mxu0 0.0
    %97 = vmatpush1.msra.mxu0 0.0
    %98 = vmatprep.subr.mxu0 0.0
    %99 = vmatpush1.msra.mxu0 0.0
    %100 = vmatprep.subr.mxu0 0.0
    %101 = vmatpush1.msra.mxu0 0.0
    %102 = vmatprep.subr.mxu0 0.0
    %103 = vmatpush1.msra.mxu0 0.0
    %104 = vmatprep.subr.mxu0 0.0
    %105 = vmatpush1.msra.mxu0 0.0
    %106 = vmatprep.subr.mxu0 0.0
    %107 = vmatpush1.msra.mxu0 0.0
    %108 = vmatprep.subr.mxu0 0.0
    %109 = vmatpush1.msra.mxu0 0.0
    %110 = vmatprep.subr.mxu0 0.0
    %111 = vmatpush1.msra.mxu0 0.0
    %112 = vmatprep.subr.mxu0 0.0
    %113 = vmatpush1.msra.mxu0 0.0
    %114 = vmatprep.subr.mxu0 0.0
    %115 = vmatpush1.msra.mxu0 0.0
    %116 = vmatprep.subr.mxu0 0.0
    %117 = vmatpush1.msra.mxu0 0.0
    %118 = vmatprep.subr.mxu0 0.0
    %119 = vmatpush1.msra.mxu0 0.0
    %120 = vmatprep.subr.mxu0 0.0
    %121 = vmatpush1.msra.mxu0 0.0
    %122 = vmatprep.subr.mxu0 0.0
    %123 = vmatpush1.msra.mxu0 0.0
    %124 = vmatprep.subr.mxu0 0.0
    %125 = vmatpush1.msra.mxu0 0.0
    %126 = vmatprep.subr.mxu0 0.0
    %127 = vmatpush1.msra.mxu0 0.0
    %128 = vmatprep.subr.mxu0 0.0
    %129 = vmatpush1.msra.mxu0 0.0
    %130 = vmatprep.subr.mxu0 0.0
    %131 = vmatpush1.msra.mxu0 0.0
    %132 = vmatprep.subr.mxu0 0.0
    %133 = vmatpush1.msra.mxu0 0.0
    %134 = vmatprep.subr.mxu0 0.0
    %135 = vmatpush1.msra.mxu0 0.0
    %136 = vmatprep.subr.mxu0 0.0
    %137 = vmatpush1.msra.mxu0 0.0
    %138 = vmatprep.subr.mxu0 0.0
    %139 = vmatpush1.msra.mxu0 0.0
    %140 = vmatprep.subr.mxu0 0.0
    %141 = vmatpush1.msra.mxu0 0.0
    %142 = vmatprep.subr.mxu0 0.0
    %143 = vmatpush1.msra.mxu0 0.0
    %144 = vmatprep.subr.mxu0 0.0
    %145 = vmatpush1.msra.mxu0 0.0
    %146 = vmatprep.subr.mxu0 0.0
    %147 = vmatpush1.msra.mxu0 0.0
    %148 = vmatprep.subr.mxu0 0.0
    %149 = vmatpush1.msra.mxu0 0.0
    %150 = vmatprep.subr.mxu0 0.0
    %151 = vmatpush1.msra.mxu0 0.0
    %152 = vmatprep.mubr.f32.mxu0 0.0
    %153 = vmatmul.mubr.f32.gmra.mrb[0].mxu0 %v83
    %v154 = vpop.f32.mrb[0].mxu0
    %v155 = vadd.f32 0.0, %v154
    %v156 = vpop.f32.mrb[0].mxu0
    %157 = vmatprep.mubr.f32.mxu0 0.0
    %158 = vmatmul.mubr.f32.gmra.mrb[0].mxu0 %v86
    %v159 = vpop.f32.mrb[0].mxu0
    %v160 = vadd.f32 0.0, %v159
    %v161 = vpop.f32.mrb[0].mxu0
    %162 = vdwg.mxu0
    %v163 = vxor.u32 %v155, 2147483648
    %v164 = vxor.u32 %v160, 2147483648
    %v165 = vmul.f32 %v163, 1.442695
    %v166 = vpow.pop %v165
    %v167 = vmul.f32 %v164, 1.442695
    %v168 = vpow.pop %v167
    %v169 = vadd.f32 %v166, 1.0
    %v170 = vadd.f32 %v168, 1.0
    %v171 = vrcp.pop %v169
    %v172 = vmul.f32 1.0, %v171
    %v173 = vrcp.pop %v170
    %v174 = vmul.f32 1.0, %v173
    %v175 = vld [vmem:[#allocation7] sm:$0x1]
    %v177 = vlaneseq
    %v178 = vshrl.u32 %v177, 7
    %v179 = vsub.s32 0, %v178
    %v180 = vrot.slane %v175, %v179
    %v182 = vmul.f32 %v172, %v180
    %v183 = vmul.f32 %v174, %v180
    %v184 = vld [vmem:[#allocation8] sm:$0x1]
    %v186 = vlaneseq
    %v187 = vshrl.u32 %v186, 7
    %v188 = vsub.s32 0, %v187
    %v189 = vrot.slane %v184, %v188
    %v191 = vadd.f32 %v182, %v189
    %v192 = vadd.f32 %v183, %v189
    %v193 = vmax.f32 %v191, 1e-09
    %v194 = vmax.f32 %v192, 1e-09
    %v195 = vmin.f32 %v193, 1.0
    %v196 = vmin.f32 %v194, 1.0
    %v197 = vld [vmem:[#allocation10] sm:$0xff]
    %v198 = vld [vmem:[#allocation10 + $0x8] sm:$0xff]
    %v199 = vlog2.pop %v195
    %v200 = vmul.f32 %v199, 0.6931472
    %v201 = vlog2.pop %v196
    %v202 = vmul.f32 %v201, 0.6931472
    %v203 = vadd.f32 %v197, %v200
    %v204 = vadd.f32 %v198, %v202
    %205 = vst [vmem:[#allocation10] sm:$0xff] %v203
    %206 = vst [vmem:[#allocation10 + $0x8] sm:$0xff] %v204
    %v207 = vld [vmem:[#allocation2] sm:$0xff]
    %v208 = vld [vmem:[#allocation2 + $0x8] sm:$0xff]
    %s209 = scalar_lea.vmem [#allocation5], 32
    %v210 = vld [vmem:[%s209] sm:$0xff]
    %v211 = vld [vmem:[%s209 + $0x8] sm:$0xff]
    %v212 = vld [vmem:[%s209 + $0x10] sm:$0xff]
    %v213 = vld [vmem:[%s209 + $0x18] sm:$0xff]
    %v215 = vsel %vm81, %v207, 0
    %v218 = vsel %vm81, %v208, 0
    %220 = vmatprep.subr.mxu0 0.0
    %221 = vmatpush1.msra.mxu0 %v210
    %222 = vmatprep.subr.mxu0 0.0
    %223 = vmatpush1.msra.mxu0 %v211
    %224 = vmatprep.subr.mxu0 0.0
    %225 = vmatpush1.msra.mxu0 %v212
    %226 = vmatprep.subr.mxu0 0.0
    %227 = vmatpush1.msra.mxu0 %v213
    %228 = vmatprep.subr.mxu0 0.0
    %229 = vmatpush1.msra.mxu0 0.0
    %230 = vmatprep.subr.mxu0 0.0
    %231 = vmatpush1.msra.mxu0 0.0
    %232 = vmatprep.subr.mxu0 0.0
    %233 = vmatpush1.msra.mxu0 0.0
    %234 = vmatprep.subr.mxu0 0.0
    %235 = vmatpush1.msra.mxu0 0.0
    %236 = vmatprep.subr.mxu0 0.0
    %237 = vmatpush1.msra.mxu0 0.0
    %238 = vmatprep.subr.mxu0 0.0
    %239 = vmatpush1.msra.mxu0 0.0
    %240 = vmatprep.subr.mxu0 0.0
    %241 = vmatpush1.msra.mxu0 0.0
    %242 = vmatprep.subr.mxu0 0.0
    %243 = vmatpush1.msra.mxu0 0.0
    %244 = vmatprep.subr.mxu0 0.0
    %245 = vmatpush1.msra.mxu0 0.0
    %246 = vmatprep.subr.mxu0 0.0
    %247 = vmatpush1.msra.mxu0 0.0
    %248 = vmatprep.subr.mxu0 0.0
    %249 = vmatpush1.msra.mxu0 0.0
    %250 = vmatprep.subr.mxu0 0.0
    %251 = vmatpush1.msra.mxu0 0.0
    %252 = vmatprep.subr.mxu0 0.0
    %253 = vmatpush1.msra.mxu0 0.0
    %254 = vmatprep.subr.mxu0 0.0
    %255 = vmatpush1.msra.mxu0 0.0
    %256 = vmatprep.subr.mxu0 0.0
    %257 = vmatpush1.msra.mxu0 0.0
    %258 = vmatprep.subr.mxu0 0.0
    %259 = vmatpush1.msra.mxu0 0.0
    %260 = vmatprep.subr.mxu0 0.0
    %261 = vmatpush1.msra.mxu0 0.0
    %262 = vmatprep.subr.mxu0 0.0
    %263 = vmatpush1.msra.mxu0 0.0
    %264 = vmatprep.subr.mxu0 0.0
    %265 = vmatpush1.msra.mxu0 0.0
    %266 = vmatprep.subr.mxu0 0.0
    %267 = vmatpush1.msra.mxu0 0.0
    %268 = vmatprep.subr.mxu0 0.0
    %269 = vmatpush1.msra.mxu0 0.0
    %270 = vmatprep.subr.mxu0 0.0
    %271 = vmatpush1.msra.mxu0 0.0
    %272 = vmatprep.subr.mxu0 0.0
    %273 = vmatpush1.msra.mxu0 0.0
    %274 = vmatprep.subr.mxu0 0.0
    %275 = vmatpush1.msra.mxu0 0.0
    %276 = vmatprep.subr.mxu0 0.0
    %277 = vmatpush1.msra.mxu0 0.0
    %278 = vmatprep.subr.mxu0 0.0
    %279 = vmatpush1.msra.mxu0 0.0
    %280 = vmatprep.subr.mxu0 0.0
    %281 = vmatpush1.msra.mxu0 0.0
    %282 = vmatprep.subr.mxu0 0.0
    %283 = vmatpush1.msra.mxu0 0.0
    %284 = vmatprep.mubr.f32.mxu0 0.0
    %285 = vmatmul.mubr.f32.gmra.mrb[0].mxu0 %v215
    %v286 = vpop.f32.mrb[0].mxu0
    %v287 = vadd.f32 0.0, %v286
    %v288 = vpop.f32.mrb[0].mxu0
    %289 = vmatprep.mubr.f32.mxu0 0.0
    %290 = vmatmul.mubr.f32.gmra.mrb[0].mxu0 %v218
    %v291 = vpop.f32.mrb[0].mxu0
    %v292 = vadd.f32 0.0, %v291
    %v293 = vpop.f32.mrb[0].mxu0
    %294 = vdwg.mxu0
    %v295 = vxor.u32 %v287, 2147483648
    %v296 = vxor.u32 %v292, 2147483648
    %v297 = vmul.f32 %v295, 1.442695
    %v298 = vpow.pop %v297
    %v299 = vmul.f32 %v296, 1.442695
    %v300 = vpow.pop %v299
    %v301 = vadd.f32 %v298, 1.0
    %v302 = vadd.f32 %v300, 1.0
    %v303 = vrcp.pop %v301
    %v304 = vmul.f32 1.0, %v303
    %v305 = vrcp.pop %v302
    %v306 = vmul.f32 1.0, %v305
    %s307 = scalar_lea.vmem [#allocation7], 1
    %v308 = vld [vmem:[%s307] sm:$0x1]
    %v310 = vlaneseq
    %v311 = vshrl.u32 %v310, 7
    %v312 = vsub.s32 0, %v311
    %v313 = vrot.slane %v308, %v312
    %v315 = vmul.f32 %v304, %v313
    %v316 = vmul.f32 %v306, %v313
    %s317 = scalar_lea.vmem [#allocation8], 1
    %v318 = vld [vmem:[%s317] sm:$0x1]
    %v320 = vlaneseq
    %v321 = vshrl.u32 %v320, 7
    %v322 = vsub.s32 0, %v321
    %v323 = vrot.slane %v318, %v322
    %v325 = vadd.f32 %v315, %v323
    %v326 = vadd.f32 %v316, %v323
    %v327 = vmax.f32 %v325, 1e-09
    %v328 = vmax.f32 %v326, 1e-09
    %v329 = vmin.f32 %v327, 1.0
    %v330 = vmin.f32 %v328, 1.0
    %v331 = vld [vmem:[#allocation10] sm:$0xff]
    %v332 = vld [vmem:[#allocation10 + $0x8] sm:$0xff]
    %v333 = vlog2.pop %v329
    %v334 = vmul.f32 %v333, 0.6931472
    %v335 = vlog2.pop %v330
    %v336 = vmul.f32 %v335, 0.6931472
    %v337 = vadd.f32 %v331, %v334
    %v338 = vadd.f32 %v332, %v336
    %339 = vst [vmem:[#allocation10] sm:$0xff] %v337
    %340 = vst [vmem:[#allocation10 + $0x8] sm:$0xff] %v338
    %v341 = vld [vmem:[#allocation2] sm:$0xff]
    %v342 = vld [vmem:[#allocation2 + $0x8] sm:$0xff]
    %s343 = scalar_lea.vmem [#allocation5], 64
    %v344 = vld [vmem:[%s343] sm:$0xff]
    %v345 = vld [vmem:[%s343 + $0x8] sm:$0xff]
    %v346 = vld [vmem:[%s343 + $0x10] sm:$0xff]
    %v347 = vld [vmem:[%s343 + $0x18] sm:$0xff]
    %v349 = vsel %vm81, %v341, 0
    %v352 = vsel %vm81, %v342, 0
    %354 = vmatprep.subr.mxu0 0.0
    %355 = vmatpush1.msra.mxu0 %v344
    %356 = vmatprep.subr.mxu0 0.0
    %357 = vmatpush1.msra.mxu0 %v345
    %358 = vmatprep.subr.mxu0 0.0
    %359 = vmatpush1.msra.mxu0 %v346
    %360 = vmatprep.subr.mxu0 0.0
    %361 = vmatpush1.msra.mxu0 %v347
    %362 = vmatprep.subr.mxu0 0.0
    %363 = vmatpush1.msra.mxu0 0.0
    %364 = vmatprep.subr.mxu0 0.0
    %365 = vmatpush1.msra.mxu0 0.0
    %366 = vmatprep.subr.mxu0 0.0
    %367 = vmatpush1.msra.mxu0 0.0
    %368 = vmatprep.subr.mxu0 0.0
    %369 = vmatpush1.msra.mxu0 0.0
    %370 = vmatprep.subr.mxu0 0.0
    %371 = vmatpush1.msra.mxu0 0.0
    %372 = vmatprep.subr.mxu0 0.0
    %373 = vmatpush1.msra.mxu0 0.0
    %374 = vmatprep.subr.mxu0 0.0
    %375 = vmatpush1.msra.mxu0 0.0
    %376 = vmatprep.subr.mxu0 0.0
    %377 = vmatpush1.msra.mxu0 0.0
    %378 = vmatprep.subr.mxu0 0.0
    %379 = vmatpush1.msra.mxu0 0.0
    %380 = vmatprep.subr.mxu0 0.0
    %381 = vmatpush1.msra.mxu0 0.0
    %382 = vmatprep.subr.mxu0 0.0
    %383 = vmatpush1.msra.mxu0 0.0
    %384 = vmatprep.subr.mxu0 0.0
    %385 = vmatpush1.msra.mxu0 0.0
    %386 = vmatprep.subr.mxu0 0.0
    %387 = vmatpush1.msra.mxu0 0.0
    %388 = vmatprep.subr.mxu0 0.0
    %389 = vmatpush1.msra.mxu0 0.0
    %390 = vmatprep.subr.mxu0 0.0
    %391 = vmatpush1.msra.mxu0 0.0
    %392 = vmatprep.subr.mxu0 0.0
    %393 = vmatpush1.msra.mxu0 0.0
    %394 = vmatprep.subr.mxu0 0.0
    %395 = vmatpush1.msra.mxu0 0.0
    %396 = vmatprep.subr.mxu0 0.0
    %397 = vmatpush1.msra.mxu0 0.0
    %398 = vmatprep.subr.mxu0 0.0
    %399 = vmatpush1.msra.mxu0 0.0
    %400 = vmatprep.subr.mxu0 0.0
    %401 = vmatpush1.msra.mxu0 0.0
    %402 = vmatprep.subr.mxu0 0.0
    %403 = vmatpush1.msra.mxu0 0.0
    %404 = vmatprep.subr.mxu0 0.0
    %405 = vmatpush1.msra.mxu0 0.0
    %406 = vmatprep.subr.mxu0 0.0
    %407 = vmatpush1.msra.mxu0 0.0
    %408 = vmatprep.subr.mxu0 0.0
    %409 = vmatpush1.msra.mxu0 0.0
    %410 = vmatprep.subr.mxu0 0.0
    %411 = vmatpush1.msra.mxu0 0.0
    %412 = vmatprep.subr.mxu0 0.0
    %413 = vmatpush1.msra.mxu0 0.0
    %414 = vmatprep.subr.mxu0 0.0
    %415 = vmatpush1.msra.mxu0 0.0
    %416 = vmatprep.subr.mxu0 0.0
    %417 = vmatpush1.msra.mxu0 0.0
    %418 = vmatprep.mubr.f32.mxu0 0.0
    %419 = vmatmul.mubr.f32.gmra.mrb[0].mxu0 %v349
    %v420 = vpop.f32.mrb[0].mxu0
    %v421 = vadd.f32 0.0, %v420
    %v422 = vpop.f32.mrb[0].mxu0
    %423 = vmatprep.mubr.f32.mxu0 0.0
    %424 = vmatmul.mubr.f32.gmra.mrb[0].mxu0 %v352
    %v425 = vpop.f32.mrb[0].mxu0
    %v426 = vadd.f32 0.0, %v425
    %v427 = vpop.f32.mrb[0].mxu0
    %428 = vdwg.mxu0
    %v429 = vxor.u32 %v421, 2147483648
    %v430 = vxor.u32 %v426, 2147483648
    %v431 = vmul.f32 %v429, 1.442695
    %v432 = vpow.pop %v431
    %v433 = vmul.f32 %v430, 1.442695
    %v434 = vpow.pop %v433
    %v435 = vadd.f32 %v432, 1.0
    %v436 = vadd.f32 %v434, 1.0
    %v437 = vrcp.pop %v435
    %v438 = vmul.f32 1.0, %v437
    %v439 = vrcp.pop %v436
    %v440 = vmul.f32 1.0, %v439
    %s441 = scalar_lea.vmem [#allocation7], 2
    %v442 = vld [vmem:[%s441] sm:$0x1]
    %v444 = vlaneseq
    %v445 = vshrl.u32 %v444, 7
    %v446 = vsub.s32 0, %v445
    %v447 = vrot.slane %v442, %v446
    %v449 = vmul.f32 %v438, %v447
    %v450 = vmul.f32 %v440, %v447
    %s451 = scalar_lea.vmem [#allocation8], 2
    %v452 = vld [vmem:[%s451] sm:$0x1]
    %v454 = vlaneseq
    %v455 = vshrl.u32 %v454, 7
    %v456 = vsub.s32 0, %v455
    %v457 = vrot.slane %v452, %v456
    %v459 = vadd.f32 %v449, %v457
    %v460 = vadd.f32 %v450, %v457
    %v461 = vmax.f32 %v459, 1e-09
    %v462 = vmax.f32 %v460, 1e-09
    %v463 = vmin.f32 %v461, 1.0
    %v464 = vmin.f32 %v462, 1.0
    %v465 = vld [vmem:[#allocation10] sm:$0xff]
    %v466 = vld [vmem:[#allocation10 + $0x8] sm:$0xff]
    %v467 = vlog2.pop %v463
    %v468 = vmul.f32 %v467, 0.6931472
    %v469 = vlog2.pop %v464
    %v470 = vmul.f32 %v469, 0.6931472
    %v471 = vadd.f32 %v465, %v468
    %v472 = vadd.f32 %v466, %v470
    %473 = vst [vmem:[#allocation10] sm:$0xff] %v471
    %474 = vst [vmem:[#allocation10 + $0x8] sm:$0xff] %v472
    %v475 = vld [vmem:[#allocation2] sm:$0xff]
    %v476 = vld [vmem:[#allocation2 + $0x8] sm:$0xff]
    %s477 = scalar_lea.vmem [#allocation5], 96
    %v478 = vld [vmem:[%s477] sm:$0xff]
    %v479 = vld [vmem:[%s477 + $0x8] sm:$0xff]
    %v480 = vld [vmem:[%s477 + $0x10] sm:$0xff]
    %v481 = vld [vmem:[%s477 + $0x18] sm:$0xff]
    %v483 = vsel %vm81, %v475, 0
    %v486 = vsel %vm81, %v476, 0
    %488 = vmatprep.subr.mxu0 0.0
    %489 = vmatpush1.msra.mxu0 %v478
    %490 = vmatprep.subr.mxu0 0.0
    %491 = vmatpush1.msra.mxu0 %v479
    %492 = vmatprep.subr.mxu0 0.0
    %493 = vmatpush1.msra.mxu0 %v480
    %494 = vmatprep.subr.mxu0 0.0
    %495 = vmatpush1.msra.mxu0 %v481
    %496 = vmatprep.subr.mxu0 0.0
    %497 = vmatpush1.msra.mxu0 0.0
    %498 = vmatprep.subr.mxu0 0.0
    %499 = vmatpush1.msra.mxu0 0.0
    %500 = vmatprep.subr.mxu0 0.0
    %501 = vmatpush1.msra.mxu0 0.0
    %502 = vmatprep.subr.mxu0 0.0
    %503 = vmatpush1.msra.mxu0 0.0
    %504 = vmatprep.subr.mxu0 0.0
    %505 = vmatpush1.msra.mxu0 0.0
    %506 = vmatprep.subr.mxu0 0.0
    %507 = vmatpush1.msra.mxu0 0.0
    %508 = vmatprep.subr.mxu0 0.0
    %509 = vmatpush1.msra.mxu0 0.0
    %510 = vmatprep.subr.mxu0 0.0
    %511 = vmatpush1.msra.mxu0 0.0
    %512 = vmatprep.subr.mxu0 0.0
    %513 = vmatpush1.msra.mxu0 0.0
    %514 = vmatprep.subr.mxu0 0.0
    %515 = vmatpush1.msra.mxu0 0.0
    %516 = vmatprep.subr.mxu0 0.0
    %517 = vmatpush1.msra.mxu0 0.0
    %518 = vmatprep.subr.mxu0 0.0
    %519 = vmatpush1.msra.mxu0 0.0
    %520 = vmatprep.subr.mxu0 0.0
    %521 = vmatpush1.msra.mxu0 0.0
    %522 = vmatprep.subr.mxu0 0.0
    %523 = vmatpush1.msra.mxu0 0.0
    %524 = vmatprep.subr.mxu0 0.0
    %525 = vmatpush1.msra.mxu0 0.0
    %526 = vmatprep.subr.mxu0 0.0
    %527 = vmatpush1.msra.mxu0 0.0
    %528 = vmatprep.subr.mxu0 0.0
    %529 = vmatpush1.msra.mxu0 0.0
    %530 = vmatprep.subr.mxu0 0.0
    %531 = vmatpush1.msra.mxu0 0.0
    %532 = vmatprep.subr.mxu0 0.0
    %533 = vmatpush1.msra.mxu0 0.0
    %534 = vmatprep.subr.mxu0 0.0
    %535 = vmatpush1.msra.mxu0 0.0
    %536 = vmatprep.subr.mxu0 0.0
    %537 = vmatpush1.msra.mxu0 0.0
    %538 = vmatprep.subr.mxu0 0.0
    %539 = vmatpush1.msra.mxu0 0.0
    %540 = vmatprep.subr.mxu0 0.0
    %541 = vmatpush1.msra.mxu0 0.0
    %542 = vmatprep.subr.mxu0 0.0
    %543 = vmatpush1.msra.mxu0 0.0
    %544 = vmatprep.subr.mxu0 0.0
    %545 = vmatpush1.msra.mxu0 0.0
    %546 = vmatprep.subr.mxu0 0.0
    %547 = vmatpush1.msra.mxu0 0.0
    %548 = vmatprep.subr.mxu0 0.0
    %549 = vmatpush1.msra.mxu0 0.0
    %550 = vmatprep.subr.mxu0 0.0
    %551 = vmatpush1.msra.mxu0 0.0
    %552 = vmatprep.mubr.f32.mxu0 0.0
    %553 = vmatmul.mubr.f32.gmra.mrb[0].mxu0 %v483
    %v554 = vpop.f32.mrb[0].mxu0
    %v555 = vadd.f32 0.0, %v554
    %v556 = vpop.f32.mrb[0].mxu0
    %557 = vmatprep.mubr.f32.mxu0 0.0
    %558 = vmatmul.mubr.f32.gmra.mrb[0].mxu0 %v486
    %v559 = vpop.f32.mrb[0].mxu0
    %v560 = vadd.f32 0.0, %v559
    %v561 = vpop.f32.mrb[0].mxu0
    %562 = vdwg.mxu0
    %v563 = vxor.u32 %v555, 2147483648
    %v564 = vxor.u32 %v560, 2147483648
    %v565 = vmul.f32 %v563, 1.442695
    %v566 = vpow.pop %v565
    %v567 = vmul.f32 %v564, 1.442695
    %v568 = vpow.pop %v567
    %v569 = vadd.f32 %v566, 1.0
    %v570 = vadd.f32 %v568, 1.0
    %v571 = vrcp.pop %v569
    %v572 = vmul.f32 1.0, %v571
    %v573 = vrcp.pop %v570
    %v574 = vmul.f32 1.0, %v573
    %s575 = scalar_lea.vmem [#allocation7], 3
    %v576 = vld [vmem:[%s575] sm:$0x1]
    %v578 = vlaneseq
    %v579 = vshrl.u32 %v578, 7
    %v580 = vsub.s32 0, %v579
    %v581 = vrot.slane %v576, %v580
    %v583 = vmul.f32 %v572, %v581
    %v584 = vmul.f32 %v574, %v581
    %s585 = scalar_lea.vmem [#allocation8], 3
    %v586 = vld [vmem:[%s585] sm:$0x1]
    %v588 = vlaneseq
    %v589 = vshrl.u32 %v588, 7
    %v590 = vsub.s32 0, %v589
    %v591 = vrot.slane %v586, %v590
    %v593 = vadd.f32 %v583, %v591
    %v594 = vadd.f32 %v584, %v591
    %v595 = vmax.f32 %v593, 1e-09
    %v596 = vmax.f32 %v594, 1e-09
    %v597 = vmin.f32 %v595, 1.0
    %v598 = vmin.f32 %v596, 1.0
    %v599 = vld [vmem:[#allocation10] sm:$0xff]
    %v600 = vld [vmem:[#allocation10 + $0x8] sm:$0xff]
    %v601 = vlog2.pop %v597
    %v602 = vmul.f32 %v601, 0.6931472
    %v603 = vlog2.pop %v598
    %v604 = vmul.f32 %v603, 0.6931472
    %v605 = vadd.f32 %v599, %v602
    %v606 = vadd.f32 %v600, %v604
    %607 = vst [vmem:[#allocation10] sm:$0xff] %v605
    %608 = vst [vmem:[#allocation10 + $0x8] sm:$0xff] %v606
    // Predicated region
    $region34: #{hsoftmax_forward.1} parent=1 // pred_check
      _
    $region35: #{hsoftmax_forward.1} parent=1 // pred_check_branch
      %610 = sbr.rel (0) target = $region37
    $region36: #{hsoftmax_forward.1} parent=1 // pred_region
      %s612 = ssub.s32 256, 256
      %613 = vsyncadd [#allocation4], %s612
      %s614 = sshll.u32 [#allocation10], 4
      %s615 = int_to_ptr.vmem [resolvable:$true] %s614
      %620 = dma.vmem_to_hbm [thread:$0]  %s615, 256, %s4, [#allocation4], 128, 128, 8
    $region37: #{hsoftmax_forward.1} parent=1 // pred_fallthru
      _
    // Predicated region
    $region38: #{hsoftmax_forward.1} parent=1 // pred_check
      _
    $region39: #{hsoftmax_forward.1} parent=1 // pred_check_branch
      %622 = sbr.rel (0) target = $region41
    $region40: #{hsoftmax_forward.1} parent=1 // pred_region
      %623 = dma.done [#allocation4], 256
    $region41: #{hsoftmax_forward.1} parent=1 // pred_fallthru
      _
    %624 = vsyncpa [#allocation3], 1
    %625 = vsyncpa [#allocation6], 1
    %626 = vsyncpa [#allocation9], 1
    %627 = vsyncpa [#allocation4], 1

</llo_original>
